<compile_context>
chip_gen: v7x
topology: tpu7x:2x2x1
jax: 0.10.0
libtpu: 0.0.40
codegen_flags: <defaults>
</compile_context>

<pallas_src>
import jax
import jax.numpy as jnp
from jax.experimental import pallas as pl
from jax.experimental.pallas import tpu as pltpu


def _gemm_bias_sigmoid_kernel(patches_ref, w_ref, b_ref, o_ref):
    # patches_ref : VMEM (N, Cin*KH*KW, Ho*Wo)  im2col'd input (per-image slabs)
    # w_ref       : VMEM (Cout, Cin*KH*KW)      flattened OIHW conv weights
    # b_ref       : VMEM (Cout, 1)              bias
    # o_ref       : VMEM (N, Cout, Ho*Wo)       lane-dense per-image output slabs
    n = patches_ref.shape[0]
    w = w_ref[...]
    b = b_ref[...]
    for i in range(n):  # N=2: static unroll, static-index loads/stores
        acc = jnp.dot(w, patches_ref[i],
                      preferred_element_type=jnp.float32)       # MXU
        o_ref[i] = jax.nn.sigmoid(acc + b).astype(o_ref.dtype)  # VPU + EUP


@jax.jit
def conv2d_sigmoid(x, w, b):
    """Pallas equivalent of torch.sigmoid(nn.Conv2d(3, 3, 5)(x)) in NCHW."""
    n, cin, h, w_dim = x.shape
    cout, cin_w, kh, kw = w.shape
    assert cin == cin_w
    ho, wo = h - kh + 1, w_dim - kw + 1
    k = cin * kh * kw

    # Single-HLO im2col (pure layout, no FLOPs).  Output channel dim has size
    # Cin*KH*KW ordered (ci, ih, iw) with ci slowest -> matches OIHW flatten
    # of the weights below.
    patches = jax.lax.conv_general_dilated_patches(
        x, (kh, kw), (1, 1), "VALID",
        dimension_numbers=("NCHW", "OIHW", "NCHW"))   # (N, K, Ho, Wo)
    patches = patches.reshape(n, k, ho * wo)          # free reshape

    w2d = w.reshape(cout, k)                          # (Cout, K)
    b2d = b.reshape(cout, 1)                          # (Cout, 1)

    flops = 2 * cout * k * (n * ho * wo)
    transcendentals = cout * n * ho * wo
    bytes_accessed = 4 * (n * k * ho * wo + cout * k + cout + n * cout * ho * wo)

    out = pl.pallas_call(
        _gemm_bias_sigmoid_kernel,
        out_shape=jax.ShapeDtypeStruct((n, cout, ho * wo), x.dtype),
        in_specs=[
            pl.BlockSpec(memory_space=pltpu.MemorySpace.VMEM),
            pl.BlockSpec(memory_space=pltpu.MemorySpace.VMEM),
            pl.BlockSpec(memory_space=pltpu.MemorySpace.VMEM),
        ],
        out_specs=pl.BlockSpec(memory_space=pltpu.MemorySpace.VMEM),
        cost_estimate=pl.CostEstimate(
            flops=flops,
            transcendentals=transcendentals,
            bytes_accessed=bytes_accessed),
    )(patches, w2d, b2d)

    # (N, Cout, Ho*Wo) -> (N, Cout, Ho, Wo): free reshape, no transpose.
    return out.reshape(n, cout, ho, wo)


def _reference(x, w, b):
    # Pure-JAX reference (NCHW conv, VALID padding) + sigmoid.
    y = jax.lax.conv_general_dilated(
        x, w, window_strides=(1, 1), padding="VALID",
        dimension_numbers=("NCHW", "OIHW", "NCHW"),
    )
    return jax.nn.sigmoid(y + b[None, :, None, None])


if __name__ == "__main__":
    key = jax.random.PRNGKey(0)
    kx, kw_key, kb = jax.random.split(key, 3)

    N, CIN, H, W = 2, 3, 16, 16
    COUT, KH, KW = 3, 5, 5

    x = jax.random.normal(kx, (N, CIN, H, W), dtype=jnp.float32)
    # Deterministic uniform-ish init matching PyTorch Conv2d param shapes.
    fan_in = CIN * KH * KW
    bound = 1.0 / (fan_in ** 0.5)
    w = jax.random.uniform(kw_key, (COUT, CIN, KH, KW), jnp.float32, -bound, bound)
    b = jax.random.uniform(kb, (COUT,), jnp.float32, -bound, bound)

    out = conv2d_sigmoid(x, w, b)
    out = jax.block_until_ready(out)

    ref = jax.block_until_ready(_reference(x, w, b))
    assert out.shape == (N, COUT, H - KH + 1, W - KW + 1)
    assert jnp.allclose(out, ref, atol=2e-5, rtol=2e-5)

    print("KERNEL_OK")
</pallas_src>

<mosaic_0001>
module attributes {stable_mosaic.version = 11 : i64} {
  func.func @_gemm_bias_sigmoid_kernel(%arg0: memref<2x75x144xf32, #tpu.memory_space<vmem>>, %arg1: memref<3x75xf32, #tpu.memory_space<vmem>>, %arg2: memref<3x1xf32, #tpu.memory_space<vmem>>, %arg3: memref<2x3x144xf32, #tpu.memory_space<vmem>>) attributes {dimension_semantics = [], scalar_prefetch = 0 : i64, scratch_operands = 0 : i64, tpu.core_type = #tpu.core_type<tc>} {
    %c0 = arith.constant 0 : index
    %c0_0 = arith.constant 0 : index
    %0 = vector.load %arg1[%c0, %c0_0] : memref<3x75xf32, #tpu.memory_space<vmem>>, vector<3x75xf32>
    %c0_1 = arith.constant 0 : index
    %c0_2 = arith.constant 0 : index
    %1 = vector.load %arg2[%c0_1, %c0_2] : memref<3x1xf32, #tpu.memory_space<vmem>>, vector<3x1xf32>
    %c0_3 = arith.constant 0 : index
    %c0_4 = arith.constant 0 : index
    %c0_5 = arith.constant 0 : index
    %2 = vector.load %arg0[%c0_3, %c0_4, %c0_5] : memref<2x75x144xf32, #tpu.memory_space<vmem>>, vector<1x75x144xf32>
    %3 = vector.shape_cast %2 : vector<1x75x144xf32> to vector<75x144xf32>
    %cst = arith.constant dense<0.000000e+00> : vector<3x144xf32>
    %4 = tpu.matmul %0, %3, %cst {dimension_numbers = #tpu.dot_dimension_numbers<[1], [0], [0], [1], [0, 0, 1, 1], [], []>} : vector<3x75xf32>, vector<75x144xf32>, vector<3x144xf32> -> vector<3x144xf32>
    %5 = vector.broadcast %1 : vector<3x1xf32> to vector<3x144xf32>
    %6 = arith.addf %4, %5 : vector<3x144xf32>
    %7 = arith.negf %6 : vector<3x144xf32>
    %8 = math.exp %7 : vector<3x144xf32>
    %cst_6 = arith.constant 1.000000e+00 : f32
    %9 = vector.broadcast %cst_6 : f32 to vector<3x144xf32>
    %10 = arith.addf %9, %8 : vector<3x144xf32>
    %11 = arith.divf %9, %10 : vector<3x144xf32>
    %c0_7 = arith.constant 0 : index
    %c0_8 = arith.constant 0 : index
    %c0_9 = arith.constant 0 : index
    %12 = vector.load %arg3[%c0_7, %c0_8, %c0_9] : memref<2x3x144xf32, #tpu.memory_space<vmem>>, vector<1x3x144xf32>
    %13 = vector.shape_cast %12 : vector<1x3x144xf32> to vector<3x144xf32>
    %14 = vector.shape_cast %11 : vector<3x144xf32> to vector<1x3x144xf32>
    tpu.vector_store %arg3[%c0_7, %c0_8, %c0_9], %14 {strides = array<i32>} : memref<2x3x144xf32, #tpu.memory_space<vmem>>, vector<1x3x144xf32>,
    %c1 = arith.constant 1 : index
    %c0_10 = arith.constant 0 : index
    %c0_11 = arith.constant 0 : index
    %15 = vector.load %arg0[%c1, %c0_10, %c0_11] : memref<2x75x144xf32, #tpu.memory_space<vmem>>, vector<1x75x144xf32>
    %16 = vector.shape_cast %15 : vector<1x75x144xf32> to vector<75x144xf32>
    %cst_12 = arith.constant dense<0.000000e+00> : vector<3x144xf32>
    %17 = tpu.matmul %0, %16, %cst_12 {dimension_numbers = #tpu.dot_dimension_numbers<[1], [0], [0], [1], [0, 0, 1, 1], [], []>} : vector<3x75xf32>, vector<75x144xf32>, vector<3x144xf32> -> vector<3x144xf32>
    %18 = vector.broadcast %1 : vector<3x1xf32> to vector<3x144xf32>
    %19 = arith.addf %17, %18 : vector<3x144xf32>
    %20 = arith.negf %19 : vector<3x144xf32>
    %21 = math.exp %20 : vector<3x144xf32>
    %cst_13 = arith.constant 1.000000e+00 : f32
    %22 = vector.broadcast %cst_13 : f32 to vector<3x144xf32>
    %23 = arith.addf %22, %21 : vector<3x144xf32>
    %24 = arith.divf %22, %23 : vector<3x144xf32>
    %c1_14 = arith.constant 1 : index
    %c0_15 = arith.constant 0 : index
    %c0_16 = arith.constant 0 : index
    %25 = vector.load %arg3[%c1_14, %c0_15, %c0_16] : memref<2x3x144xf32, #tpu.memory_space<vmem>>, vector<1x3x144xf32>
    %26 = vector.shape_cast %25 : vector<1x3x144xf32> to vector<3x144xf32>
    %27 = vector.shape_cast %24 : vector<3x144xf32> to vector<1x3x144xf32>
    tpu.vector_store %arg3[%c1_14, %c0_15, %c0_16], %27 {strides = array<i32>} : memref<2x3x144xf32, #tpu.memory_space<vmem>>, vector<1x3x144xf32>,
    return
  }
}

</mosaic_0001>

<llo_original>
// kernel: conv2d_sigmoid.1
$region0: #{conv2d_sigmoid.1}
  #allocation0 [shape = 'u32[]', space=smem, size = 0x4, offset = 0x4, fixed_abs, tag = 'smem constant byte address 0x4 - core index']
  #allocation1 [shape = 'u32[144,128]{1,0:T(1,128)}', space=vmem, size = 0x12000, scoped, tag = 'internal scratch']
  %s0 = inlined_call_operand.vmem [shape: f32[2,75,144], index: 0, kind: input, shape index: {}]
  %s1 = inlined_call_operand.vmem [shape: f32[3,75], index: 1, kind: input, shape index: {}]
  %s2 = inlined_call_operand.vmem [shape: f32[3,1], index: 2, kind: input, shape index: {}]
  %s3 = inlined_call_operand.vmem [shape: f32[2,3,144], index: 3, kind: output, shape index: {}]
  %s4 = sld [smem:[#allocation0]]
  $region22: #{conv2d_sigmoid.1} parent=0
    _
  %s6 = ssub.s32 1, %s4
  %s7 = scalar_select 0, %s6, %s4
  // Predicated region
  $region2: #{conv2d_sigmoid.1} parent=0 // pred_check
    _
  $region3: #{conv2d_sigmoid.1} parent=0 // pred_check_branch
    %9 = sbr.rel (0) target = $region5
  $region4: #{conv2d_sigmoid.1} parent=0 // pred_region
    _
  $region5: #{conv2d_sigmoid.1} parent=0 // pred_fallthru
    _
  // Predicated region
  $region6: #{conv2d_sigmoid.1} parent=0 // pred_check
    _
  $region7: #{conv2d_sigmoid.1} parent=0 // pred_check_branch
    %11 = sbr.rel (0) target = $region9
  $region8: #{conv2d_sigmoid.1} parent=0 // pred_region
    _
  $region9: #{conv2d_sigmoid.1} parent=0 // pred_fallthru
    _
  // Predicated region
  $region10: #{conv2d_sigmoid.1} parent=0 // pred_check
    _
  $region11: #{conv2d_sigmoid.1} parent=0 // pred_check_branch
    %13 = sbr.rel (0) target = $region13
  $region12: #{conv2d_sigmoid.1} parent=0 // pred_region
    _
  $region13: #{conv2d_sigmoid.1} parent=0 // pred_fallthru
    _
  %v14 = vld [vmem:[%s1] sm:$0x7]
  %v15 = vld [vmem:[%s2] sm:$0x7]
  %v16 = vld [vmem:[%s0] sm:$0xff]
  %v17 = vld [vmem:[%s0 + $0x8] sm:$0xff]
  %v18 = vld [vmem:[%s0 + $0x10] sm:$0xff]
  %v19 = vld [vmem:[%s0 + $0x18] sm:$0xff]
  %v20 = vld [vmem:[%s0 + $0x20] sm:$0xff]
  %v21 = vld [vmem:[%s0 + $0x28] sm:$0xff]
  %v22 = vld [vmem:[%s0 + $0x30] sm:$0xff]
  %v23 = vld [vmem:[%s0 + $0x38] sm:$0xff]
  %v24 = vld [vmem:[%s0 + $0x40] sm:$0xff]
  %v25 = vld [vmem:[%s0 + $0x48] sm:$0xff]
  %v26 = vld [vmem:[%s0 + $0x50] sm:$0xff]
  %v27 = vld [vmem:[%s0 + $0x58] sm:$0xff]
  %v28 = vld [vmem:[%s0 + $0x60] sm:$0xff]
  %v29 = vld [vmem:[%s0 + $0x68] sm:$0xff]
  %v30 = vld [vmem:[%s0 + $0x70] sm:$0xff]
  %v31 = vld [vmem:[%s0 + $0x78] sm:$0xff]
  %v32 = vld [vmem:[%s0 + $0x80] sm:$0xff]
  %v33 = vld [vmem:[%s0 + $0x88] sm:$0xff]
  %v34 = vld [vmem:[%s0 + $0x90] sm:$0x7]
  %v35 = vld [vmem:[%s0 + $0x98] sm:$0x7]
  %37 = vset.pattern.permute.xlu0 0
  %38 = vperm.xlu0 %37, %v15
  %v39 = vpop.permute.xlu0 %38
  %vm41 = vcmask 613376
  %v43 = vsel %vm41, %v14, 0
  %vm45 = vcmask 1042432
  %v47 = vsel %vm45, %v34, 0
  %v50 = vsel %vm45, %v35, 0
  %52 = vmatprep.subr.mxu0 %v17
  %53 = vmatpush1.msra.mxu0 %v16
  %54 = vmatprep.subr.mxu0 %v19
  %55 = vmatpush1.msra.mxu0 %v18
  %56 = vmatprep.subr.mxu0 %v21
  %57 = vmatpush1.msra.mxu0 %v20
  %58 = vmatprep.subr.mxu0 %v23
  %59 = vmatpush1.msra.mxu0 %v22
  %60 = vmatprep.subr.mxu0 %v25
  %61 = vmatpush1.msra.mxu0 %v24
  %62 = vmatprep.subr.mxu0 %v27
  %63 = vmatpush1.msra.mxu0 %v26
  %64 = vmatprep.subr.mxu0 %v29
  %65 = vmatpush1.msra.mxu0 %v28
  %66 = vmatprep.subr.mxu0 %v31
  %67 = vmatpush1.msra.mxu0 %v30
  %68 = vmatprep.subr.mxu0 %v33
  %69 = vmatpush1.msra.mxu0 %v32
  %70 = vmatprep.subr.mxu0 %v50
  %71 = vmatpush1.msra.mxu0 %v47
  %72 = vmatprep.subr.mxu0 0.0
  %73 = vmatpush1.msra.mxu0 0.0
  %74 = vmatprep.subr.mxu0 0.0
  %75 = vmatpush1.msra.mxu0 0.0
  %76 = vmatprep.subr.mxu0 0.0
  %77 = vmatpush1.msra.mxu0 0.0
  %78 = vmatprep.subr.mxu0 0.0
  %79 = vmatpush1.msra.mxu0 0.0
  %80 = vmatprep.subr.mxu0 0.0
  %81 = vmatpush1.msra.mxu0 0.0
  %82 = vmatprep.subr.mxu0 0.0
  %83 = vmatpush1.msra.mxu0 0.0
  %84 = vmatprep.subr.mxu0 0.0
  %85 = vmatpush1.msra.mxu0 0.0
  %86 = vmatprep.subr.mxu0 0.0
  %87 = vmatpush1.msra.mxu0 0.0
  %88 = vmatprep.subr.mxu0 0.0
  %89 = vmatpush1.msra.mxu0 0.0
  %90 = vmatprep.subr.mxu0 0.0
  %91 = vmatpush1.msra.mxu0 0.0
  %92 = vmatprep.subr.mxu0 0.0
  %93 = vmatpush1.msra.mxu0 0.0
  %94 = vmatprep.subr.mxu0 0.0
  %95 = vmatpush1.msra.mxu0 0.0
  %96 = vmatprep.subr.mxu0 0.0
  %97 = vmatpush1.msra.mxu0 0.0
  %98 = vmatprep.subr.mxu0 0.0
  %99 = vmatpush1.msra.mxu0 0.0
  %100 = vmatprep.subr.mxu0 0.0
  %101 = vmatpush1.msra.mxu0 0.0
  %102 = vmatprep.subr.mxu0 0.0
  %103 = vmatpush1.msra.mxu0 0.0
  %104 = vmatprep.subr.mxu0 0.0
  %105 = vmatpush1.msra.mxu0 0.0
  %106 = vmatprep.subr.mxu0 0.0
  %107 = vmatpush1.msra.mxu0 0.0
  %108 = vmatprep.subr.mxu0 0.0
  %109 = vmatpush1.msra.mxu0 0.0
  %110 = vmatprep.subr.mxu0 0.0
  %111 = vmatpush1.msra.mxu0 0.0
  %112 = vmatprep.subr.mxu0 0.0
  %113 = vmatpush1.msra.mxu0 0.0
  %114 = vmatprep.subr.mxu0 0.0
  %115 = vmatpush1.msra.mxu0 0.0
  %116 = vmatprep.mubr.f32.mxu0 0.0
  %117 = vmatmul.mubr.f32.gmra.mrb[0].mxu0 %v43
  %v118 = vpop.f32.mrb[0].mxu0
  %v119 = vadd.f32 %v39, %v118
  %v120 = vpop.f32.mrb[0].mxu0
  %v121 = vadd.f32 %v39, %v120
  %122 = vdwg.mxu0
  %v123 = vxor.u32 %v119, 2147483648
  %v124 = vxor.u32 %v121, 2147483648
  %v125 = vmul.f32 %v123, 1.442695
  %v126 = vpow.pop %v125
  %v127 = vmul.f32 %v124, 1.442695
  %v128 = vpow.pop %v127
  %v129 = vadd.f32 %v126, 1.0
  %v130 = vadd.f32 %v128, 1.0
  %v131 = vrcp.pop %v129
  %v132 = vmul.f32 1.0, %v131
  %v133 = vrcp.pop %v130
  %v134 = vmul.f32 1.0, %v133
  %v137 = vcombine.low %v132, %v134
  %vm139 = vcmask 129028
  %vm140 = vmor %vm139, %vm45
  %141 = vst.msk [vmem:[%s3] sm:$0x77] %vm140, %v137
  %s142 = scalar_lea.vmem %s0, 160
  %v143 = vld [vmem:[%s142] sm:$0xff]
  %v144 = vld [vmem:[%s142 + $0x8] sm:$0xff]
  %v145 = vld [vmem:[%s142 + $0x10] sm:$0xff]
  %v146 = vld [vmem:[%s142 + $0x18] sm:$0xff]
  %v147 = vld [vmem:[%s142 + $0x20] sm:$0xff]
  %v148 = vld [vmem:[%s142 + $0x28] sm:$0xff]
  %v149 = vld [vmem:[%s142 + $0x30] sm:$0xff]
  %v150 = vld [vmem:[%s142 + $0x38] sm:$0xff]
  %v151 = vld [vmem:[%s142 + $0x40] sm:$0xff]
  %v152 = vld [vmem:[%s142 + $0x48] sm:$0xff]
  %v153 = vld [vmem:[%s142 + $0x50] sm:$0xff]
  %v154 = vld [vmem:[%s142 + $0x58] sm:$0xff]
  %v155 = vld [vmem:[%s142 + $0x60] sm:$0xff]
  %v156 = vld [vmem:[%s142 + $0x68] sm:$0xff]
  %v157 = vld [vmem:[%s142 + $0x70] sm:$0xff]
  %v158 = vld [vmem:[%s142 + $0x78] sm:$0xff]
  %v159 = vld [vmem:[%s142 + $0x80] sm:$0xff]
  %v160 = vld [vmem:[%s142 + $0x88] sm:$0xff]
  %v161 = vld [vmem:[%s142 + $0x90] sm:$0x7]
  %v162 = vld [vmem:[%s142 + $0x98] sm:$0x7]
  %v164 = vsel %vm45, %v161, 0
  %v167 = vsel %vm45, %v162, 0
  %169 = vmatprep.subr.mxu0 %v144
  %170 = vmatpush1.msra.mxu0 %v143
  %171 = vmatprep.subr.mxu0 %v146
  %172 = vmatpush1.msra.mxu0 %v145
  %173 = vmatprep.subr.mxu0 %v148
  %174 = vmatpush1.msra.mxu0 %v147
  %175 = vmatprep.subr.mxu0 %v150
  %176 = vmatpush1.msra.mxu0 %v149
  %177 = vmatprep.subr.mxu0 %v152
  %178 = vmatpush1.msra.mxu0 %v151
  %179 = vmatprep.subr.mxu0 %v154
  %180 = vmatpush1.msra.mxu0 %v153
  %181 = vmatprep.subr.mxu0 %v156
  %182 = vmatpush1.msra.mxu0 %v155
  %183 = vmatprep.subr.mxu0 %v158
  %184 = vmatpush1.msra.mxu0 %v157
  %185 = vmatprep.subr.mxu0 %v160
  %186 = vmatpush1.msra.mxu0 %v159
  %187 = vmatprep.subr.mxu0 %v167
  %188 = vmatpush1.msra.mxu0 %v164
  %189 = vmatprep.subr.mxu0 0.0
  %190 = vmatpush1.msra.mxu0 0.0
  %191 = vmatprep.subr.mxu0 0.0
  %192 = vmatpush1.msra.mxu0 0.0
  %193 = vmatprep.subr.mxu0 0.0
  %194 = vmatpush1.msra.mxu0 0.0
  %195 = vmatprep.subr.mxu0 0.0
  %196 = vmatpush1.msra.mxu0 0.0
  %197 = vmatprep.subr.mxu0 0.0
  %198 = vmatpush1.msra.mxu0 0.0
  %199 = vmatprep.subr.mxu0 0.0
  %200 = vmatpush1.msra.mxu0 0.0
  %201 = vmatprep.subr.mxu0 0.0
  %202 = vmatpush1.msra.mxu0 0.0
  %203 = vmatprep.subr.mxu0 0.0
  %204 = vmatpush1.msra.mxu0 0.0
  %205 = vmatprep.subr.mxu0 0.0
  %206 = vmatpush1.msra.mxu0 0.0
  %207 = vmatprep.subr.mxu0 0.0
  %208 = vmatpush1.msra.mxu0 0.0
  %209 = vmatprep.subr.mxu0 0.0
  %210 = vmatpush1.msra.mxu0 0.0
  %211 = vmatprep.subr.mxu0 0.0
  %212 = vmatpush1.msra.mxu0 0.0
  %213 = vmatprep.subr.mxu0 0.0
  %214 = vmatpush1.msra.mxu0 0.0
  %215 = vmatprep.subr.mxu0 0.0
  %216 = vmatpush1.msra.mxu0 0.0
  %217 = vmatprep.subr.mxu0 0.0
  %218 = vmatpush1.msra.mxu0 0.0
  %219 = vmatprep.subr.mxu0 0.0
  %220 = vmatpush1.msra.mxu0 0.0
  %221 = vmatprep.subr.mxu0 0.0
  %222 = vmatpush1.msra.mxu0 0.0
  %223 = vmatprep.subr.mxu0 0.0
  %224 = vmatpush1.msra.mxu0 0.0
  %225 = vmatprep.subr.mxu0 0.0
  %226 = vmatpush1.msra.mxu0 0.0
  %227 = vmatprep.subr.mxu0 0.0
  %228 = vmatpush1.msra.mxu0 0.0
  %229 = vmatprep.subr.mxu0 0.0
  %230 = vmatpush1.msra.mxu0 0.0
  %231 = vmatprep.subr.mxu0 0.0
  %232 = vmatpush1.msra.mxu0 0.0
  %233 = vmatprep.mubr.f32.mxu0 0.0
  %234 = vmatmul.mubr.f32.gmra.mrb[0].mxu0 %v43
  %v235 = vpop.f32.mrb[0].mxu0
  %v236 = vadd.f32 %v39, %v235
  %v237 = vpop.f32.mrb[0].mxu0
  %v238 = vadd.f32 %v39, %v237
  %239 = vdwg.mxu0
  %v240 = vxor.u32 %v236, 2147483648
  %v241 = vxor.u32 %v238, 2147483648
  %v242 = vmul.f32 %v240, 1.442695
  %v243 = vpow.pop %v242
  %v244 = vmul.f32 %v241, 1.442695
  %v245 = vpow.pop %v244
  %v246 = vadd.f32 %v243, 1.0
  %v247 = vadd.f32 %v245, 1.0
  %v248 = vrcp.pop %v246
  %v249 = vmul.f32 1.0, %v248
  %v250 = vrcp.pop %v247
  %v251 = vmul.f32 1.0, %v250
  %v254 = vcombine.low %v249, %v251
  %s256 = scalar_lea.vmem %s3, 8
  %257 = vst.msk [vmem:[%s256] sm:$0x77] %vm140, %v254
  // Predicated region
  $region14: #{conv2d_sigmoid.1} parent=0 // pred_check
    _
  $region15: #{conv2d_sigmoid.1} parent=0 // pred_check_branch
    %259 = sbr.rel (0) target = $region17
  $region16: #{conv2d_sigmoid.1} parent=0 // pred_region
    _
  $region17: #{conv2d_sigmoid.1} parent=0 // pred_fallthru
    _
  // Predicated region
  $region18: #{conv2d_sigmoid.1} parent=0 // pred_check
    _
  $region19: #{conv2d_sigmoid.1} parent=0 // pred_check_branch
    %261 = sbr.rel (0) target = $region21
  $region20: #{conv2d_sigmoid.1} parent=0 // pred_region
    _
  $region21: #{conv2d_sigmoid.1} parent=0 // pred_fallthru
    _

</llo_original>
